<compile_context>
chip_gen: v5e
topology: v5e:2x2
jax: 0.10.0
libtpu: 0.0.40
codegen_flags: <defaults>
</compile_context>

<pallas_src>
import jax
import jax.numpy as jnp
from jax.experimental import pallas as pl
from jax.experimental.pallas import tpu as pltpu


def _round_up(x, m):
    return (x + m - 1) // m * m


def _vmem_budget_bytes():
    # Generation-aware VMEM budget (~75% of physical: ~48 MiB on v7x,
    # ~96 MiB on v5e/v6e).  Fall back to the smallest (v7x) if the query fails.
    try:
        cap = pltpu.get_tpu_info().vmem_capacity_bytes
    except Exception:
        cap = 64 * 1024 * 1024
    return int(cap) * 3 // 4


def unembed_kernel(x_ref, w_ref, b_ref, o_ref):
    # x_ref: (tm, d_model)  bf16 residual-stream tile
    # w_ref: (d_model, tn)  bf16 W_U vocab slab (resident across inner row loop)
    # b_ref: (1, tn)        f32 bias vocab slab (broadcast over rows)
    # o_ref: (tm, tn)       f32 logits tile
    acc = jnp.dot(x_ref[...], w_ref[...], preferred_element_type=jnp.float32)
    o_ref[...] = (acc + b_ref[...]).astype(o_ref.dtype)


def unembed(resid, w_u, b_u, *, tm=None, tn=None):
    """resid: f32 [B, S, d_model]; w_u: f32 [d_model, d_vocab]; b_u: f32 [d_vocab]
    -> logits f32 [B, S, d_vocab]."""
    B, S, d_model = resid.shape
    dm_w, d_vocab = w_u.shape
    assert d_model == dm_w, "d_model mismatch between resid and W_U"
    M = B * S

    # Tile defaults: MXU/lane friendly (256-multiples suit the v6e/v7x 256x256
    # MXU), sized well under the per-generation VMEM budget.
    if tn is None:
        tn = min(2048, _round_up(d_vocab, 256))
    if tm is None:
        tm = M if M <= 512 else 512
    assert tn % 128 == 0, "tn must be a multiple of 128 (lane width)"
    assert tm == M or tm % 8 == 0, "tm must be a multiple of 8 (sublane) or equal M"

    # Pad vocab to a multiple of tn: every tile full, stores lane-dense.
    v_pad = _round_up(d_vocab, tn)

    # bf16 MXU operands; bias / accumulation / logits stay f32.
    x = resid.reshape(M, d_model).astype(jnp.bfloat16)
    w = w_u.astype(jnp.bfloat16)
    b2 = b_u.reshape(1, d_vocab).astype(jnp.float32)
    if v_pad != d_vocab:
        w = jnp.pad(w, ((0, 0), (0, v_pad - d_vocab)))
        b2 = jnp.pad(b2, ((0, 0), (0, v_pad - d_vocab)))

    n_vocab_tiles = v_pad // tn
    n_row_tiles = pl.cdiv(M, tm)
    grid = (n_vocab_tiles, n_row_tiles)  # vocab OUTER, rows INNER

    # Double-buffered per-step VMEM footprint + generation-aware limit.
    footprint = 2 * (tm * d_model * 2 + d_model * tn * 2 + tn * 4 + tm * tn * 4)
    budget = _vmem_budget_bytes()
    assert footprint <= budget, (
        f"tile footprint {footprint} B exceeds VMEM budget {budget} B; shrink tm/tn")
    vmem_limit = int(min(budget, max(footprint + (4 << 20), 16 << 20)))

    cost = pl.CostEstimate(
        flops=2 * M * d_model * v_pad,
        transcendentals=0,
        bytes_accessed=(
            n_vocab_tiles * M * d_model * 2   # x re-streamed once per vocab tile
            + d_model * v_pad * 2             # W_U streamed exactly once
            + v_pad * 4                       # bias
            + M * v_pad * 4                   # logits writeback
        ),
    )

    out = pl.pallas_call(
        unembed_kernel,
        out_shape=jax.ShapeDtypeStruct((M, v_pad), jnp.float32),
        grid_spec=pltpu.PrefetchScalarGridSpec(
            num_scalar_prefetch=0,
            grid=grid,
            in_specs=[
                pl.BlockSpec((tm, d_model), lambda j, i: (i, 0)),   # x rows
                pl.BlockSpec((d_model, tn), lambda j, i: (0, j)),   # W_U slab
                pl.BlockSpec((1, tn), lambda j, i: (0, j)),         # bias slab
            ],
            out_specs=pl.BlockSpec((tm, tn), lambda j, i: (i, j)),
        ),
        compiler_params=pltpu.CompilerParams(
            # vocab axis (outer) is megacore-sharded on v7x so each TensorCore
            # streams only half of W_U; row axis is the sequential inner loop.
            dimension_semantics=("parallel", "arbitrary"),
            vmem_limit_bytes=vmem_limit,
        ),
        cost_estimate=cost,
    )(x, w, b2)

    if v_pad != d_vocab:
        out = out[:, :d_vocab]
    return out.reshape(B, S, d_vocab)


if __name__ == "__main__":
    # Small, Config-consistent shapes (scaled down from gpt2-small).
    d_model = 128
    init_range = 0.02
    B, S = 2, 8

    key = jax.random.PRNGKey(0)
    k_w, k_x, k_b = jax.random.split(key, 3)

    resid = jax.random.normal(k_x, (B, S, d_model), dtype=jnp.float32)

    # Test 1: zero bias (fresh init), vocab already a clean multiple of 256.
    d_vocab = 256
    W_U = (init_range * jax.random.normal(k_w, (d_model, d_vocab))).astype(jnp.float32)
    b_U = jnp.zeros((d_vocab,), jnp.float32)

    logits = jax.block_until_ready(unembed(resid, W_U, b_U))
    ref = jnp.einsum("bpd,dv->bpv", resid, W_U) + b_U
    assert logits.shape == (B, S, d_vocab)
    assert jnp.allclose(logits, ref, atol=2e-2, rtol=2e-2), float(
        jnp.max(jnp.abs(logits - ref)))

    # Test 2: nonzero bias, ragged vocab (250 -> padded to 256) with explicit
    # small tiles to exercise a (2, 2) grid (multi vocab tiles + multi row tiles).
    d_vocab2 = 250
    W2 = (init_range * jax.random.normal(k_w, (d_model, d_vocab2))).astype(jnp.float32)
    b2 = (0.1 * jax.random.normal(k_b, (d_vocab2,))).astype(jnp.float32)

    logits2 = jax.block_until_ready(unembed(resid, W2, b2, tm=8, tn=128))
    ref2 = jnp.einsum("bpd,dv->bpv", resid, W2) + b2
    assert logits2.shape == (B, S, d_vocab2)
    assert jnp.allclose(logits2, ref2, atol=2e-2, rtol=2e-2), float(
        jnp.max(jnp.abs(logits2 - ref2)))

    print("KERNEL_OK")
</pallas_src>

<mosaic_0001>
module attributes {stable_mosaic.version = 11 : i64} {
  func.func @unembed_kernel(%arg0: i32, %arg1: i32, %arg2: memref<16x128xbf16, #tpu.memory_space<vmem>>, %arg3: memref<128x256xbf16, #tpu.memory_space<vmem>>, %arg4: memref<1x256xf32, #tpu.memory_space<vmem>>, %arg5: memref<16x256xf32, #tpu.memory_space<vmem>>) attributes {dimension_semantics = [#tpu.dimension_semantics<parallel>, #tpu.dimension_semantics<arbitrary>], iteration_bounds = array<i64: 1, 1>, scalar_prefetch = 0 : i64, scratch_operands = 0 : i64, tpu.core_type = #tpu.core_type<tc>, window_params = [{transform_indices = @transform_0, window_bounds = array<i64: 16, 128>}, {transform_indices = @transform_1, window_bounds = array<i64: 128, 256>}, {transform_indices = @transform_2, window_bounds = array<i64: 1, 256>}, {transform_indices = @transform_3, window_bounds = array<i64: 16, 256>}]} {
    %c0 = arith.constant 0 : index
    %c0_0 = arith.constant 0 : index
    %0 = vector.load %arg2[%c0, %c0_0] : memref<16x128xbf16, #tpu.memory_space<vmem>>, vector<16x128xbf16>
    %c0_1 = arith.constant 0 : index
    %c0_2 = arith.constant 0 : index
    %1 = vector.load %arg3[%c0_1, %c0_2] : memref<128x256xbf16, #tpu.memory_space<vmem>>, vector<128x256xbf16>
    %cst = arith.constant dense<0.000000e+00> : vector<16x256xf32>
    %2 = tpu.matmul %0, %1, %cst {dimension_numbers = #tpu.dot_dimension_numbers<[1], [0], [0], [1], [0, 0, 1, 1], [], []>} : vector<16x128xbf16>, vector<128x256xbf16>, vector<16x256xf32> -> vector<16x256xf32>
    %c0_3 = arith.constant 0 : index
    %c0_4 = arith.constant 0 : index
    %3 = vector.load %arg4[%c0_3, %c0_4] : memref<1x256xf32, #tpu.memory_space<vmem>>, vector<1x256xf32>
    %4 = vector.broadcast %3 : vector<1x256xf32> to vector<16x256xf32>
    %5 = arith.addf %2, %4 : vector<16x256xf32>
    %c0_5 = arith.constant 0 : index
    %c0_6 = arith.constant 0 : index
    %6 = vector.load %arg5[%c0_5, %c0_6] : memref<16x256xf32, #tpu.memory_space<vmem>>, vector<16x256xf32>
    tpu.vector_store %arg5[%c0_5, %c0_6], %5 {strides = array<i32>} : memref<16x256xf32, #tpu.memory_space<vmem>>, vector<16x256xf32>,
    return
  }
  func.func @transform_0(%arg0: i32, %arg1: i32) -> (i32, i32) {
    %c0_i32 = arith.constant 0 : i32
    %c0_i32_0 = arith.constant 0 : i32
    return %arg1, %c0_i32 : i32, i32
  }
  func.func @transform_1(%arg0: i32, %arg1: i32) -> (i32, i32) {
    %c0_i32 = arith.constant 0 : i32
    %c0_i32_0 = arith.constant 0 : i32
    return %c0_i32, %arg0 : i32, i32
  }
  func.func @transform_2(%arg0: i32, %arg1: i32) -> (i32, i32) {
    %c0_i32 = arith.constant 0 : i32
    %c0_i32_0 = arith.constant 0 : i32
    return %c0_i32, %arg0 : i32, i32
  }
  func.func @transform_3(%arg0: i32, %arg1: i32) -> (i32, i32) {
    %c0_i32 = arith.constant 0 : i32
    return %arg1, %arg0 : i32, i32
  }
}

</mosaic_0001>

<llo_original>
// kernel: tpu_custom_call.1
$region0: #{tpu_custom_call.1}
  #allocation0 [shape = 'u32[]', space=smem, size = 0x4, offset = 0x4, fixed_abs, tag = 'smem constant byte address 0x4 - core index']
  #allocation1 [shape = 'u32[72,128]{1,0:T(1,128)}', space=vmem, size = 0x9000, scoped, tag = 'internal scratch']
  %s0 = inlined_call_operand.hbm [shape: bf16[16,128], index: 0, kind: input, shape index: {}]
  %s1 = inlined_call_operand.hbm [shape: bf16[128,256], index: 1, kind: input, shape index: {}]
  %s2 = inlined_call_operand.hbm [shape: f32[1,256], index: 2, kind: input, shape index: {}]
  %s3 = inlined_call_operand.hbm [shape: f32[16,256], index: 3, kind: output, shape index: {}]
  %s4 = sld [smem:[#allocation0]]
  $region34: #{tpu_custom_call.1} parent=0
    _
  %s6 = ssub.s32 1, %s4
  %s7 = scalar_select 0, %s6, %s4
  $region1: #{tpu_custom_call.1} parent=0
    #allocation2 [shape = 'u8[4096]{0}', space=vmem, size = 0x1000, scoped, tag = 'input window, operand 0, single buffered']
    #allocation3 [shape = 's32[1]{0}', space=sflag, size = 0x4, scoped, tag = 'scoped memory for tpu_custom_call.1']
    #allocation4 [shape = 's32[1]{0}', space=sflag, size = 0x4, scoped, tag = 'scoped memory for tpu_custom_call.1']
    #allocation5 [shape = 'u8[65536]{0}', space=vmem, size = 0x10000, scoped, tag = 'input window, operand 1, single buffered']
    #allocation6 [shape = 's32[1]{0}', space=sflag, size = 0x4, scoped, tag = 'scoped memory for tpu_custom_call.1']
    #allocation7 [shape = 'u8[1024]{0}', space=vmem, size = 0x400, scoped, tag = 'input window, operand 2, single buffered']
    #allocation8 [shape = 'u8[16384]{0}', space=vmem, size = 0x4000, scoped, tag = 'output window, operand 0, single buffered']
    %8 = vsyncpa [#allocation3], 0
    %9 = vsyncpa [#allocation6], 0
    %10 = vsyncpa [#allocation4], 0
    // Predicated region
    $region2: #{tpu_custom_call.1} parent=1 // pred_check
      _
    $region3: #{tpu_custom_call.1} parent=1 // pred_check_branch
      %12 = sbr.rel (0) target = $region5
    $region4: #{tpu_custom_call.1} parent=1 // pred_region
      %14 = vsyncadd [#allocation3], 0
      %s15 = sshll.u32 %s0, 4
      %s16 = int_to_ptr.hbm [resolvable:$true] %s15
      %s17 = sshll.u32 [#allocation2], 4
      %s18 = int_to_ptr.vmem [resolvable:$true] %s17
      %23 = dma.hbm_to_vmem [thread:$0]  %s16, 128, %s18, [#allocation3], 64, 64, 4
    $region5: #{tpu_custom_call.1} parent=1 // pred_fallthru
      _
    // Predicated region
    $region6: #{tpu_custom_call.1} parent=1 // pred_check
      _
    $region7: #{tpu_custom_call.1} parent=1 // pred_check_branch
      %25 = sbr.rel (0) target = $region9
    $region8: #{tpu_custom_call.1} parent=1 // pred_region
      %27 = vsyncadd [#allocation6], 0
      %s28 = sshll.u32 %s1, 4
      %s29 = int_to_ptr.hbm [resolvable:$true] %s28
      %s30 = sshll.u32 [#allocation5], 4
      %s31 = int_to_ptr.vmem [resolvable:$true] %s30
      %36 = dma.hbm_to_vmem [thread:$0]  %s29, 2048, %s31, [#allocation6], 128, 128, 8
    $region9: #{tpu_custom_call.1} parent=1 // pred_fallthru
      _
    // Predicated region
    $region10: #{tpu_custom_call.1} parent=1 // pred_check
      _
    $region11: #{tpu_custom_call.1} parent=1 // pred_check_branch
      %38 = sbr.rel (0) target = $region13
    $region12: #{tpu_custom_call.1} parent=1 // pred_region
      %40 = vsyncadd [#allocation6], 0
      %s42 = sshll.u32 %s2, 4
      %s43 = int_to_ptr.hbm [resolvable:$true] %s42
      %s44 = sshll.u32 [#allocation7], 4
      %s45 = int_to_ptr.vmem [resolvable:$true] %s44
      %47 = dma.hbm_to_vmem [thread:$0]  %s43, 32, %s45, [#allocation6]
    $region13: #{tpu_custom_call.1} parent=1 // pred_fallthru
      _
    // Predicated region
    $region14: #{tpu_custom_call.1} parent=1 // pred_check
      _
    $region15: #{tpu_custom_call.1} parent=1 // pred_check_branch
      %49 = sbr.rel (0) target = $region17
    $region16: #{tpu_custom_call.1} parent=1 // pred_region
      %51 = dma.done [#allocation3], 128
    $region17: #{tpu_custom_call.1} parent=1 // pred_fallthru
      _
    // Predicated region
    $region18: #{tpu_custom_call.1} parent=1 // pred_check
      _
    $region19: #{tpu_custom_call.1} parent=1 // pred_check_branch
      %53 = sbr.rel (0) target = $region21
    $region20: #{tpu_custom_call.1} parent=1 // pred_region
      %55 = dma.done [#allocation6], 2048
    $region21: #{tpu_custom_call.1} parent=1 // pred_fallthru
      _
    // Predicated region
    $region22: #{tpu_custom_call.1} parent=1 // pred_check
      _
    $region23: #{tpu_custom_call.1} parent=1 // pred_check_branch
      %57 = sbr.rel (0) target = $region25
    $region24: #{tpu_custom_call.1} parent=1 // pred_region
      %59 = dma.done [#allocation6], 32
    $region25: #{tpu_custom_call.1} parent=1 // pred_fallthru
      _
    %v60 = vld [vmem:[#allocation2] sm:$0xf]
    %v61 = vld [vmem:[#allocation2 + $0x4] sm:$0xf]
    %v62 = vld [vmem:[#allocation5] sm:$0xff]
    %v63 = vld [vmem:[#allocation5 + $0x8] sm:$0xff]
    %v64 = vld [vmem:[#allocation5 + $0x10] sm:$0xff]
    %v65 = vld [vmem:[#allocation5 + $0x18] sm:$0xff]
    %v66 = vld [vmem:[#allocation5 + $0x20] sm:$0xff]
    %v67 = vld [vmem:[#allocation5 + $0x28] sm:$0xff]
    %v68 = vld [vmem:[#allocation5 + $0x30] sm:$0xff]
    %v69 = vld [vmem:[#allocation5 + $0x38] sm:$0xff]
    %v70 = vld [vmem:[#allocation5 + $0x40] sm:$0xff]
    %v71 = vld [vmem:[#allocation5 + $0x48] sm:$0xff]
    %v72 = vld [vmem:[#allocation5 + $0x50] sm:$0xff]
    %v73 = vld [vmem:[#allocation5 + $0x58] sm:$0xff]
    %v74 = vld [vmem:[#allocation5 + $0x60] sm:$0xff]
    %v75 = vld [vmem:[#allocation5 + $0x68] sm:$0xff]
    %v76 = vld [vmem:[#allocation5 + $0x70] sm:$0xff]
    %v77 = vld [vmem:[#allocation5 + $0x78] sm:$0xff]
    %v78 = vld [vmem:[#allocation7] sm:$0x3]
    %v80 = vperm.slane %v78, 0
    %v81 = vperm.slane %v78, 1
    %v86 = vunpack.c.l.b16 %v60
    %v87 = vunpack.c.l.b16 %v61
    %v88 = vpack.c.b16 %v87, %v86
    %v106 = vunpack.c.l.b16 %v62
    %v107 = vunpack.c.h.b16 %v62
    %v108 = vunpack.c.l.b16 %v63
    %v109 = vunpack.c.h.b16 %v63
    %v110 = vunpack.c.l.b16 %v64
    %v111 = vunpack.c.h.b16 %v64
    %v112 = vunpack.c.l.b16 %v65
    %v113 = vunpack.c.h.b16 %v65
    %v114 = vunpack.c.l.b16 %v66
    %v115 = vunpack.c.h.b16 %v66
    %v116 = vunpack.c.l.b16 %v67
    %v117 = vunpack.c.h.b16 %v67
    %v118 = vunpack.c.l.b16 %v68
    %v119 = vunpack.c.h.b16 %v68
    %v120 = vunpack.c.l.b16 %v69
    %v121 = vunpack.c.h.b16 %v69
    %v122 = vunpack.c.l.b16 %v70
    %v123 = vunpack.c.h.b16 %v70
    %v124 = vunpack.c.l.b16 %v71
    %v125 = vunpack.c.h.b16 %v71
    %v126 = vunpack.c.l.b16 %v72
    %v127 = vunpack.c.h.b16 %v72
    %v128 = vunpack.c.l.b16 %v73
    %v129 = vunpack.c.h.b16 %v73
    %v130 = vunpack.c.l.b16 %v74
    %v131 = vunpack.c.h.b16 %v74
    %v132 = vunpack.c.l.b16 %v75
    %v133 = vunpack.c.h.b16 %v75
    %v134 = vunpack.c.l.b16 %v76
    %v135 = vunpack.c.h.b16 %v76
    %v136 = vunpack.c.l.b16 %v77
    %v137 = vunpack.c.h.b16 %v77
    %v138 = vpack.c.b16 %v108, %v106
    %v139 = vpack.c.b16 %v109, %v107
    %v140 = vpack.c.b16 %v112, %v110
    %v141 = vpack.c.b16 %v113, %v111
    %v142 = vpack.c.b16 %v116, %v114
    %v143 = vpack.c.b16 %v117, %v115
    %v144 = vpack.c.b16 %v120, %v118
    %v145 = vpack.c.b16 %v121, %v119
    %v146 = vpack.c.b16 %v124, %v122
    %v147 = vpack.c.b16 %v125, %v123
    %v148 = vpack.c.b16 %v128, %v126
    %v149 = vpack.c.b16 %v129, %v127
    %v150 = vpack.c.b16 %v132, %v130
    %v151 = vpack.c.b16 %v133, %v131
    %v152 = vpack.c.b16 %v136, %v134
    %v153 = vpack.c.b16 %v137, %v135
    %170 = vmatpush.bf16.msra.mxu0 %v152
    %171 = vmatpush.bf16.msra.mxu0 %v150
    %172 = vmatpush.bf16.msra.mxu0 %v148
    %173 = vmatpush.bf16.msra.mxu0 %v146
    %174 = vmatpush.bf16.msra.mxu0 %v144
    %175 = vmatpush.bf16.msra.mxu0 %v142
    %176 = vmatpush.bf16.msra.mxu0 %v140
    %177 = vmatpush.bf16.msra.mxu0 %v138
    %178 = vmatmul.bf16.gmra.mxu0 %v88
    %v179 = vpop.f32.mrf.mxu0
    %v180 = vadd.f32 %v80, %v179
    %v181 = vpop.f32.mrf.mxu0
    %v182 = vadd.f32 %v80, %v181
    %183 = vdwg.mxu0
    %184 = vmatpush.bf16.msra.mxu0 %v153
    %185 = vmatpush.bf16.msra.mxu0 %v151
    %186 = vmatpush.bf16.msra.mxu0 %v149
    %187 = vmatpush.bf16.msra.mxu0 %v147
    %188 = vmatpush.bf16.msra.mxu0 %v145
    %189 = vmatpush.bf16.msra.mxu0 %v143
    %190 = vmatpush.bf16.msra.mxu0 %v141
    %191 = vmatpush.bf16.msra.mxu0 %v139
    %192 = vmatmul.bf16.gmra.mxu0 %v88
    %v193 = vpop.f32.mrf.mxu0
    %v194 = vadd.f32 %v81, %v193
    %v195 = vpop.f32.mrf.mxu0
    %v196 = vadd.f32 %v81, %v195
    %197 = vdwg.mxu0
    %198 = vst [vmem:[#allocation8] sm:$0xff] %v180
    %199 = vst [vmem:[#allocation8 + $0x8] sm:$0xff] %v194
    %200 = vst [vmem:[#allocation8 + $0x10] sm:$0xff] %v182
    %201 = vst [vmem:[#allocation8 + $0x18] sm:$0xff] %v196
    // Predicated region
    $region26: #{tpu_custom_call.1} parent=1 // pred_check
      _
    $region27: #{tpu_custom_call.1} parent=1 // pred_check_branch
      %203 = sbr.rel (0) target = $region29
    $region28: #{tpu_custom_call.1} parent=1 // pred_region
      %205 = vsyncadd [#allocation4], 0
      %s206 = sshll.u32 [#allocation8], 4
      %s207 = int_to_ptr.vmem [resolvable:$true] %s206
      %s208 = sshll.u32 %s3, 4
      %s209 = int_to_ptr.hbm [resolvable:$true] %s208
      %214 = dma.vmem_to_hbm [thread:$0]  %s207, 512, %s209, [#allocation4], 256, 256, 16
    $region29: #{tpu_custom_call.1} parent=1 // pred_fallthru
      _
    // Predicated region
    $region30: #{tpu_custom_call.1} parent=1 // pred_check
      _
    $region31: #{tpu_custom_call.1} parent=1 // pred_check_branch
      %216 = sbr.rel (0) target = $region33
    $region32: #{tpu_custom_call.1} parent=1 // pred_region
      %218 = dma.done [#allocation4], 512
    $region33: #{tpu_custom_call.1} parent=1 // pred_fallthru
      _
    %219 = vsyncpa [#allocation3], 1
    %220 = vsyncpa [#allocation6], 1
    %221 = vsyncpa [#allocation4], 1

</llo_original>
